<compile_context>
chip_gen: v7x
topology: tpu7x:2x2x1
jax: 0.10.0
libtpu: 0.0.40
codegen_flags: <defaults>
</compile_context>

<pallas_src>
import functools

import jax
import jax.numpy as jnp
from jax.experimental import pallas as pl
from jax.experimental.pallas import tpu as pltpu

_LANES = 128
_MAX_BLOCK_ROWS = 2048        # (2048, 128) f32 block = 1 MiB; x2 buffers = 2 MiB VMEM
_LOG_CLAMP = -100.0           # PyTorch BCELoss clamps log() at -100


def _partial_sums_kernel(x_ref, out_ref, *, block_rows, n_valid_rows, sub,
                         target_ones, need_mask):
    """Writes the per-tile partial sum (as a (1, sub, 128) slab) of
       -clamp(log(x), -100)      if target_ones   (BCE against ones)
       -clamp(log(1 - x), -100)  otherwise        (BCE against zeros)."""
    x = x_ref[...].astype(jnp.float32)                       # (block_rows, 128)

    neutral = 1.0 if target_ones else 0.0                    # contributes exactly 0
    if need_mask:
        # Rows past the logical end of the array (partial final block) are
        # replaced by the neutral value so they contribute 0 to the sum.
        row0 = pl.program_id(0) * block_rows
        rows = jax.lax.broadcasted_iota(jnp.int32, (block_rows, _LANES), 0) + row0
        x = jnp.where(rows < n_valid_rows, x, jnp.float32(neutral))

    t = x if target_ones else 1.0 - x
    term = -jnp.maximum(jnp.log(t), _LOG_CLAMP)               # (block_rows, 128)

    # Partial reduction to an (sub, 128) slab: whole-vreg adds (VPU), no
    # cross-lane reduce in the kernel; the final reduce happens in the wrapper.
    if sub == 8:
        partial = term.reshape(block_rows // 8, 8, _LANES).sum(axis=0)
    else:  # tiny input: block_rows == n_rows and not a multiple of 8 (grid == 1)
        partial = term.sum(axis=0, keepdims=True)             # (1, 128)

    out_ref[...] = partial.reshape(1, sub, _LANES)


def _neg_log_mean(x, target_ones):
    """mean(-clamp(log(x), -100)) if target_ones else mean(-clamp(log(1-x), -100)).

    Equivalent to nn.BCELoss()(x, ones_like(x) or zeros_like(x)).
    """
    n = x.size
    flat = x.reshape(-1)                       # free (row-major, contiguous)

    n_rows = pl.cdiv(n, _LANES)
    pad = n_rows * _LANES - n
    if pad:
        # Minimal (<128 element) neutral pad only when not lane-aligned.
        flat = jnp.pad(flat, (0, pad),
                       constant_values=(1.0 if target_ones else 0.0))
    x2d = flat.reshape(n_rows, _LANES)

    if n_rows <= _MAX_BLOCK_ROWS:
        block_rows = n_rows                    # full-dim block (always legal)
    else:
        block_rows = _MAX_BLOCK_ROWS           # multiple of 8
    grid = pl.cdiv(n_rows, block_rows)
    sub = 8 if block_rows % 8 == 0 else 1
    need_mask = (n_rows % block_rows) != 0     # partial final block -> mask rows

    kernel = functools.partial(
        _partial_sums_kernel,
        block_rows=block_rows,
        n_valid_rows=n_rows,
        sub=sub,
        target_ones=bool(target_ones),
        need_mask=need_mask,
    )

    partials = pl.pallas_call(
        kernel,
        out_shape=jax.ShapeDtypeStruct((grid, sub, _LANES), jnp.float32),
        grid_spec=pltpu.PrefetchScalarGridSpec(
            num_scalar_prefetch=0,
            grid=(grid,),
            in_specs=[pl.BlockSpec((block_rows, _LANES), lambda i: (i, 0))],
            out_specs=pl.BlockSpec((1, sub, _LANES), lambda i: (i, 0, 0)),
        ),
        compiler_params=pltpu.CompilerParams(
            dimension_semantics=("parallel",),
        ),
    )(x2d)

    return jnp.sum(partials) / jnp.float32(n)


@functools.partial(jax.jit, static_argnames=("dis_or_gen",))
def vanilla_gan_loss(d_real, d_fake, dis_or_gen=True):
    """Pallas implementation of VanillaGANLoss.forward (w_sigmoid_D=True)."""
    if dis_or_gen:
        # D loss: BCE(d_real, 1) + BCE(d_fake, 0)
        return _neg_log_mean(d_real, True) + _neg_log_mean(d_fake, False)
    # G loss: BCE(d_fake, 1)
    return _neg_log_mean(d_fake, True)


def _reference_loss(d_real, d_fake, dis_or_gen=True):
    """Plain-JAX reference mirroring torch.nn.BCELoss semantics."""
    def bce(x, target):
        x = x.astype(jnp.float32)
        logx = jnp.maximum(jnp.log(x), _LOG_CLAMP)
        log1mx = jnp.maximum(jnp.log(1.0 - x), _LOG_CLAMP)
        return jnp.mean(-(target * logx + (1.0 - target) * log1mx))

    if dis_or_gen:
        return bce(d_real, 1.0) + bce(d_fake, 0.0)
    return bce(d_fake, 1.0)


if __name__ == "__main__":
    key = jax.random.PRNGKey(0)
    k1, k2, k3 = jax.random.split(key, 3)

    # Discriminator outputs (post-sigmoid, values in (0,1)), NCHW layout.
    B, C, H, W = 2, 4, 16, 16
    d_real = jax.nn.sigmoid(jax.random.normal(k1, (B, C, H, W), jnp.float32))
    d_fake = jax.nn.sigmoid(jax.random.normal(k2, (B, C, H, W), jnp.float32))

    # Discriminator loss path (forward with dis_or_gen=True).
    loss_d = jax.block_until_ready(vanilla_gan_loss(d_real, d_fake, dis_or_gen=True))
    # Generator loss path (forward with dis_or_gen=False).
    loss_g = jax.block_until_ready(vanilla_gan_loss(d_real, d_fake, dis_or_gen=False))

    ref_d = _reference_loss(d_real, d_fake, True)
    ref_g = _reference_loss(d_real, d_fake, False)
    assert jnp.allclose(loss_d, ref_d, rtol=1e-5, atol=1e-5), (loss_d, ref_d)
    assert jnp.allclose(loss_g, ref_g, rtol=1e-5, atol=1e-5), (loss_g, ref_g)

    # Ragged-size sanity check (non lane-aligned PatchGAN-like map, bf16 input).
    d_fake_r = jax.nn.sigmoid(
        jax.random.normal(k3, (3, 1, 30, 30), jnp.float32)).astype(jnp.bfloat16)
    loss_gr = jax.block_until_ready(vanilla_gan_loss(d_real, d_fake_r, dis_or_gen=False))
    ref_gr = _reference_loss(d_real, d_fake_r, False)
    assert jnp.allclose(loss_gr, ref_gr, rtol=2e-3, atol=2e-3), (loss_gr, ref_gr)

    print("KERNEL_OK")
</pallas_src>

<mosaic_0001>
module attributes {stable_mosaic.version = 11 : i64} {
  func.func @_partial_sums_kernel(%arg0: i32, %arg1: memref<16x128xf32, #tpu.memory_space<vmem>>, %arg2: memref<1x8x128xf32, #tpu.memory_space<vmem>>) attributes {dimension_semantics = [#tpu.dimension_semantics<parallel>], iteration_bounds = array<i64: 1>, scalar_prefetch = 0 : i64, scratch_operands = 0 : i64, tpu.core_type = #tpu.core_type<tc>, window_params = [{transform_indices = @transform_0, window_bounds = array<i64: 16, 128>}, {transform_indices = @transform_1, window_bounds = array<i64: 1, 8, 128>}]} {
    %c0 = arith.constant 0 : index
    %c0_0 = arith.constant 0 : index
    %0 = vector.load %arg1[%c0, %c0_0] : memref<16x128xf32, #tpu.memory_space<vmem>>, vector<16x128xf32>
    %1 = math.log %0 : vector<16x128xf32>
    %cst = arith.constant -1.000000e+02 : f32
    %2 = vector.broadcast %cst : f32 to vector<16x128xf32>
    %3 = arith.maximumf %1, %2 : vector<16x128xf32>
    %cst_1 = arith.constant 0.000000e+00 : f32
    %4 = vector.broadcast %cst_1 : f32 to vector<16x128xf32>
    %5 = arith.subf %4, %3 : vector<16x128xf32>
    %6 = vector.shape_cast %5 : vector<16x128xf32> to vector<2x8x128xf32>
    %cst_2 = arith.constant dense<0.000000e+00> : vector<8x128xf32>
    %7 = vector.multi_reduction <add>, %6, %cst_2 [0] : vector<2x8x128xf32> to vector<8x128xf32>
    %8 = vector.shape_cast %7 : vector<8x128xf32> to vector<1x8x128xf32>
    %c0_3 = arith.constant 0 : index
    %c0_4 = arith.constant 0 : index
    %c0_5 = arith.constant 0 : index
    %9 = vector.load %arg2[%c0_3, %c0_4, %c0_5] : memref<1x8x128xf32, #tpu.memory_space<vmem>>, vector<1x8x128xf32>
    tpu.vector_store %arg2[%c0_3, %c0_4, %c0_5], %8 {strides = array<i32>} : memref<1x8x128xf32, #tpu.memory_space<vmem>>, vector<1x8x128xf32>,
    return
  }
  func.func @transform_0(%arg0: i32) -> (i32, i32) {
    %c0_i32 = arith.constant 0 : i32
    %c0_i32_0 = arith.constant 0 : i32
    return %arg0, %c0_i32 : i32, i32
  }
  func.func @transform_1(%arg0: i32) -> (i32, i32, i32) {
    %c0_i32 = arith.constant 0 : i32
    %c0_i32_0 = arith.constant 0 : i32
    %c0_i32_1 = arith.constant 0 : i32
    return %arg0, %c0_i32, %c0_i32_0 : i32, i32, i32
  }
}

module attributes {stable_mosaic.version = 11 : i64} {
  func.func @_partial_sums_kernel(%arg0: i32, %arg1: memref<16x128xf32, #tpu.memory_space<vmem>>, %arg2: memref<1x8x128xf32, #tpu.memory_space<vmem>>) attributes {dimension_semantics = [#tpu.dimension_semantics<parallel>], iteration_bounds = array<i64: 1>, scalar_prefetch = 0 : i64, scratch_operands = 0 : i64, tpu.core_type = #tpu.core_type<tc>, window_params = [{transform_indices = @transform_0, window_bounds = array<i64: 16, 128>}, {transform_indices = @transform_1, window_bounds = array<i64: 1, 8, 128>}]} {
    %c0 = arith.constant 0 : index
    %c0_0 = arith.constant 0 : index
    %0 = vector.load %arg1[%c0, %c0_0] : memref<16x128xf32, #tpu.memory_space<vmem>>, vector<16x128xf32>
    %cst = arith.constant 1.000000e+00 : f32
    %1 = vector.broadcast %cst : f32 to vector<16x128xf32>
    %2 = arith.subf %1, %0 : vector<16x128xf32>
    %3 = math.log %2 : vector<16x128xf32>
    %cst_1 = arith.constant -1.000000e+02 : f32
    %4 = vector.broadcast %cst_1 : f32 to vector<16x128xf32>
    %5 = arith.maximumf %3, %4 : vector<16x128xf32>
    %cst_2 = arith.constant 0.000000e+00 : f32
    %6 = vector.broadcast %cst_2 : f32 to vector<16x128xf32>
    %7 = arith.subf %6, %5 : vector<16x128xf32>
    %8 = vector.shape_cast %7 : vector<16x128xf32> to vector<2x8x128xf32>
    %cst_3 = arith.constant dense<0.000000e+00> : vector<8x128xf32>
    %9 = vector.multi_reduction <add>, %8, %cst_3 [0] : vector<2x8x128xf32> to vector<8x128xf32>
    %10 = vector.shape_cast %9 : vector<8x128xf32> to vector<1x8x128xf32>
    %c0_4 = arith.constant 0 : index
    %c0_5 = arith.constant 0 : index
    %c0_6 = arith.constant 0 : index
    %11 = vector.load %arg2[%c0_4, %c0_5, %c0_6] : memref<1x8x128xf32, #tpu.memory_space<vmem>>, vector<1x8x128xf32>
    tpu.vector_store %arg2[%c0_4, %c0_5, %c0_6], %10 {strides = array<i32>} : memref<1x8x128xf32, #tpu.memory_space<vmem>>, vector<1x8x128xf32>,
    return
  }
  func.func @transform_0(%arg0: i32) -> (i32, i32) {
    %c0_i32 = arith.constant 0 : i32
    %c0_i32_0 = arith.constant 0 : i32
    return %arg0, %c0_i32 : i32, i32
  }
  func.func @transform_1(%arg0: i32) -> (i32, i32, i32) {
    %c0_i32 = arith.constant 0 : i32
    %c0_i32_0 = arith.constant 0 : i32
    %c0_i32_1 = arith.constant 0 : i32
    return %arg0, %c0_i32, %c0_i32_0 : i32, i32, i32
  }
}

</mosaic_0001>

<llo_original>
// kernel: vanilla_gan_loss.2
$region0: #{vanilla_gan_loss.2}
  #allocation0 [shape = 'u32[]', space=smem, size = 0x4, offset = 0x4, fixed_abs, tag = 'smem constant byte address 0x4 - core index']
  #allocation1 [shape = 'u32[144,128]{1,0:T(1,128)}', space=vmem, size = 0x12000, scoped, tag = 'internal scratch']
  %s0 = inlined_call_operand.vmem [shape: f32[16,128], index: 0, kind: input, shape index: {}]
  %s1 = inlined_call_operand.vmem [shape: f32[1,8,128], index: 1, kind: output, shape index: {}]
  %s2 = sld [smem:[#allocation0]]
  $region14: #{vanilla_gan_loss.2} parent=0
    _
  %s4 = ssub.s32 1, %s2
  %s5 = scalar_select 0, %s4, %s2
  // Predicated region
  $region2: #{vanilla_gan_loss.2} parent=0 // pred_check
    _
  $region3: #{vanilla_gan_loss.2} parent=0 // pred_check_branch
    %7 = sbr.rel (0) target = $region5
  $region4: #{vanilla_gan_loss.2} parent=0 // pred_region
    _
  $region5: #{vanilla_gan_loss.2} parent=0 // pred_fallthru
    _
  %v8 = vld [vmem:[%s0] sm:$0xff]
  %v9 = vld [vmem:[%s0 + $0x8] sm:$0xff]
  %v10 = vlog2.pop %v8
  %v11 = vmul.f32 %v10, 0.6931472
  %v12 = vlog2.pop %v9
  %v13 = vmul.f32 %v12, 0.6931472
  %v14 = vmax.f32 %v11, -100.0
  %v15 = vmax.f32 %v13, -100.0
  %v16 = vsub.f32 0.0, %v14
  %v17 = vsub.f32 0.0, %v15
  %v18 = vadd.f32 %v16, %v17
  %19 = vst [vmem:[%s1] sm:$0xff] %v18
  // Predicated region
  $region6: #{vanilla_gan_loss.2} parent=0 // pred_check
    _
  $region7: #{vanilla_gan_loss.2} parent=0 // pred_check_branch
    %21 = sbr.rel (0) target = $region9
  $region8: #{vanilla_gan_loss.2} parent=0 // pred_region
    _
  $region9: #{vanilla_gan_loss.2} parent=0 // pred_fallthru
    _
  // Predicated region
  $region10: #{vanilla_gan_loss.2} parent=0 // pred_check
    _
  $region11: #{vanilla_gan_loss.2} parent=0 // pred_check_branch
    %23 = sbr.rel (0) target = $region13
  $region12: #{vanilla_gan_loss.2} parent=0 // pred_region
    _
  $region13: #{vanilla_gan_loss.2} parent=0 // pred_fallthru
    _

// kernel: vanilla_gan_loss.3
$region0: #{vanilla_gan_loss.3}
  #allocation0 [shape = 'u32[]', space=smem, size = 0x4, offset = 0x4, fixed_abs, tag = 'smem constant byte address 0x4 - core index']
  #allocation1 [shape = 'u32[144,128]{1,0:T(1,128)}', space=vmem, size = 0x12000, scoped, tag = 'internal scratch']
  %s0 = inlined_call_operand.vmem [shape: f32[16,128], index: 0, kind: input, shape index: {}]
  %s1 = inlined_call_operand.vmem [shape: f32[1,8,128], index: 1, kind: output, shape index: {}]
  %s2 = sld [smem:[#allocation0]]
  $region14: #{vanilla_gan_loss.3} parent=0
    _
  %s4 = ssub.s32 1, %s2
  %s5 = scalar_select 0, %s4, %s2
  // Predicated region
  $region2: #{vanilla_gan_loss.3} parent=0 // pred_check
    _
  $region3: #{vanilla_gan_loss.3} parent=0 // pred_check_branch
    %7 = sbr.rel (0) target = $region5
  $region4: #{vanilla_gan_loss.3} parent=0 // pred_region
    _
  $region5: #{vanilla_gan_loss.3} parent=0 // pred_fallthru
    _
  %v8 = vld [vmem:[%s0] sm:$0xff]
  %v9 = vld [vmem:[%s0 + $0x8] sm:$0xff]
  %v10 = vsub.f32 1.0, %v8
  %v11 = vsub.f32 1.0, %v9
  %v12 = vlog2.pop %v10
  %v13 = vmul.f32 %v12, 0.6931472
  %v14 = vlog2.pop %v11
  %v15 = vmul.f32 %v14, 0.6931472
  %v16 = vmax.f32 %v13, -100.0
  %v17 = vmax.f32 %v15, -100.0
  %v18 = vsub.f32 0.0, %v16
  %v19 = vsub.f32 0.0, %v17
  %v20 = vadd.f32 %v18, %v19
  %21 = vst [vmem:[%s1] sm:$0xff] %v20
  // Predicated region
  $region6: #{vanilla_gan_loss.3} parent=0 // pred_check
    _
  $region7: #{vanilla_gan_loss.3} parent=0 // pred_check_branch
    %23 = sbr.rel (0) target = $region9
  $region8: #{vanilla_gan_loss.3} parent=0 // pred_region
    _
  $region9: #{vanilla_gan_loss.3} parent=0 // pred_fallthru
    _
  // Predicated region
  $region10: #{vanilla_gan_loss.3} parent=0 // pred_check
    _
  $region11: #{vanilla_gan_loss.3} parent=0 // pred_check_branch
    %25 = sbr.rel (0) target = $region13
  $region12: #{vanilla_gan_loss.3} parent=0 // pred_region
    _
  $region13: #{vanilla_gan_loss.3} parent=0 // pred_fallthru
    _

</llo_original>
